<compile_context>
chip_gen: v7x
topology: tpu7x:2x2x1
jax: 0.10.0
libtpu: 0.0.40
codegen_flags: <defaults>
</compile_context>

<pallas_src>
import jax
import jax.numpy as jnp
from jax.experimental import pallas as pl
from jax.experimental.pallas import tpu as pltpu


def _round_up(x, m):
    return -(-x // m) * m


# ----------------------------------------------------------------------------
# Kernels
# ----------------------------------------------------------------------------
def _linear_kernel(x_ref, w_ref, b_ref, o_ref):
    # Full-K contraction in one block: bias added exactly once per output tile.
    acc = jnp.dot(x_ref[...], w_ref[...], preferred_element_type=jnp.float32)
    o_ref[...] = (acc + b_ref[...]).astype(o_ref.dtype)


def _linear_kernel_ktiled(x_ref, w_ref, b_ref, o_ref, acc_ref):
    # K-tiled path: f32 VMEM accumulator; init at k==0, bias+cast at k==last.
    k = pl.program_id(2)

    @pl.when(k == 0)
    def _():
        acc_ref[...] = jnp.zeros_like(acc_ref)

    acc_ref[...] += jnp.dot(x_ref[...], w_ref[...],
                            preferred_element_type=jnp.float32)

    @pl.when(k == pl.num_programs(2) - 1)
    def _():
        o_ref[...] = (acc_ref[...] + b_ref[...]).astype(o_ref.dtype)


# ----------------------------------------------------------------------------
# Tiling policy
# ----------------------------------------------------------------------------
_TM_CAPS = (2048, 1024, 512, 256, 128)


def _vmem_budget_and_cap():
    """(tile budget, physical VMEM) — generation-aware, v7x-safe fallback."""
    cap = 64 * 1024 * 1024  # conservative default (v7x: 64 MiB / TensorCore)
    try:
        info = pltpu.get_tpu_info()
        cap = int(getattr(info, "vmem_capacity_bytes", cap))
    except Exception:
        pass
    # ~37.5% of physical for our (double-buffered) tiles; headroom for Mosaic
    # internal scratch and the second pipeline stage.
    return int(cap * 3 // 8), cap


def _tile_bytes(tm, tn, tk, in_isz, out_isz, k_tiled):
    """VMEM footprint of one tiling choice, including (8,128) layout padding."""
    tmp = _round_up(tm, 8)
    tk_lane = _round_up(tk, 128)
    tk_sub = _round_up(tk, 8)
    tnp = _round_up(tn, 128)
    x = 2 * tmp * tk_lane * in_isz        # double-buffered X tile
    w = 2 * tk_sub * tnp * in_isz         # double-buffered weight tile
    b = 2 * 8 * tnp * 4                   # double-buffered bias tile (f32)
    o = 2 * tmp * tnp * out_isz           # double-buffered output tile
    acc = tmp * tnp * 4 if k_tiled else 0  # f32 accumulator scratch
    return x + w + b + o + acc


def _choose_tiling(M, K, Nout, in_isz, out_isz, budget):
    def fits(tm, tn, tk, k_tiled):
        return _tile_bytes(tm, tn, tk, in_isz, out_isz, k_tiled) <= budget

    def pick_tm(tn, tk, k_tiled):
        for cap in _TM_CAPS:
            tm = M if M <= cap else cap   # full-dim block when M is small
            if fits(tm, tn, tk, k_tiled):
                return tm
        return None

    best = None  # (tm, tn, tk, k_tiled)

    # Plan A: whole weight resident (tn = Nout, tk = K) -> weight read once.
    tm_a = pick_tm(Nout, K, False)
    if tm_a is not None:
        best = (tm_a, Nout, K, False)
    else:
        # Plan B: tile Nout with a multiple-of-128 lane tile.
        tn_b = 512 if Nout > 512 else _round_up(Nout, 128)
        tm_b = pick_tm(tn_b, K, False)
        if tm_b is not None:
            best = (tm_b, tn_b, K, False)
        if tm_b is None or tm_b < 256:
            # Plan C: also tile K (exact divisor, multiple of 128 -> no edge
            # garbage in the accumulation) instead of shrinking tm further.
            tk_div = None
            for c in (1024, 896, 768, 640, 512, 384, 256, 128):
                if c < K and K % c == 0:
                    tk_div = c
                    break
            if tk_div is not None:
                tm_c = pick_tm(tn_b, tk_div, True)
                if tm_c is not None and (tm_b is None or tm_c > tm_b):
                    best = (tm_c, tn_b, tk_div, True)
        if best is None:
            tm_d = pick_tm(128, K, False)
            if tm_d is not None:
                best = (tm_d, 128, K, False)
        if best is None:
            # Give up on the budget; vmem_limit is raised to the estimate.
            best = (M if M <= 128 else 128, 128, K, False)

    tm, tn, tk, k_tiled = best

    grid_m = pl.cdiv(M, tm)
    grid_n = pl.cdiv(Nout, tn)
    grid_k = pl.cdiv(K, tk)

    # Megacore (v7x, 2 TCs): expose >= 2 steps along a parallel axis when the
    # problem is big enough to be worth sharding.
    if grid_m * grid_n * grid_k == 1:
        if M >= 512:
            tm = _round_up(-(-M // 2), 8)
            grid_m = pl.cdiv(M, tm)
        elif Nout >= 1024 and Nout % 256 == 0:
            tn = Nout // 2
            grid_n = 2

    # Operand-residency-aware loop order (only matters when K is one block):
    # (m outer, n inner) re-fetches the weight grid_m times; (n outer, m inner)
    # re-fetches X grid_n times.  Pick the cheaper one.
    n_outer = False
    if grid_k == 1 and grid_m > 1 and grid_n > 1:
        w_refetch = (grid_m - 1) * K * Nout
        x_refetch = (grid_n - 1) * M * K
        n_outer = w_refetch > x_refetch

    return tm, tn, tk, k_tiled, grid_m, grid_n, grid_k, n_outer


# ----------------------------------------------------------------------------
# Pallas-backed linear
# ----------------------------------------------------------------------------
def pallas_linear(x2d, weight, bias, *, out_dtype=None, allow_x_fusion=False):
    """y = x2d @ weight + bias on the MXU.  x2d:(M,K) weight:(K,N) bias:(N,)."""
    M, K = x2d.shape
    Kw, Nout = weight.shape
    assert K == Kw, (K, Kw)
    out_dtype = out_dtype if out_dtype is not None else x2d.dtype

    in_isz = max(jnp.dtype(x2d.dtype).itemsize, jnp.dtype(weight.dtype).itemsize)
    out_isz = jnp.dtype(out_dtype).itemsize

    budget, vmem_cap = _vmem_budget_and_cap()
    tm, tn, tk, k_tiled, grid_m, grid_n, grid_k, n_outer = _choose_tiling(
        M, K, Nout, in_isz, out_isz, budget)

    est = _tile_bytes(tm, tn, tk, in_isz, out_isz, k_tiled)
    vmem_limit = int(min(max(32 << 20, 2 * est), int(0.9 * vmem_cap)))
    vmem_limit = int(max(vmem_limit, est + (2 << 20)))

    bias2d = bias.reshape(1, Nout).astype(jnp.float32)

    if n_outer:   # weight-resident along the inner (m) axis
        grid = (grid_n, grid_m, grid_k)
        x_map = lambda j, i, k: (i, k)
        w_map = lambda j, i, k: (k, j)
        b_map = lambda j, i, k: (0, j)
        o_map = lambda j, i, k: (i, j)
    else:         # X-resident along the inner (n) axis (or single-N / K-tiled)
        grid = (grid_m, grid_n, grid_k)
        x_map = lambda i, j, k: (i, k)
        w_map = lambda i, j, k: (k, j)
        b_map = lambda i, j, k: (0, j)
        o_map = lambda i, j, k: (i, j)

    in_specs = [
        pl.BlockSpec((tm, tk), x_map),   # X row tile
        pl.BlockSpec((tk, tn), w_map),   # weight tile (DMA'd once if index const)
        pl.BlockSpec((1, tn), b_map),    # bias tile
    ]
    out_spec = pl.BlockSpec((tm, tn), o_map)

    if k_tiled:
        kernel = _linear_kernel_ktiled
        scratch = [pltpu.VMEM((tm, tn), jnp.float32)]
    else:
        kernel = _linear_kernel
        scratch = []

    # NOTE: when the weight/bias block index is constant, Pallas skips their
    # re-DMA; single-buffering them (pl.Buffered(1)) would additionally halve
    # their VMEM footprint — left at the default for compatibility since the
    # budget above already accounts for two buffers.
    out = pl.pallas_call(
        kernel,
        out_shape=jax.ShapeDtypeStruct((M, Nout), out_dtype),
        grid_spec=pltpu.PrefetchScalarGridSpec(
            num_scalar_prefetch=0,
            grid=grid,
            in_specs=in_specs,
            out_specs=out_spec,
            scratch_shapes=scratch,
        ),
        compiler_params=pltpu.CompilerParams(
            dimension_semantics=("parallel", "parallel", "arbitrary"),
            vmem_limit_bytes=vmem_limit,
            allow_input_fusion=([True, False, False] if allow_x_fusion else None),
        ),
    )(x2d, weight, bias2d)
    return out


# ----------------------------------------------------------------------------
# GLR forward
# ----------------------------------------------------------------------------
def glr_forward(X, weight, bias, ylength, compute_dtype=None):
    """Pallas-backed GLR forward.

    X: (B, T, N, F) -> (B, ylength, N, out_dim // ylength)
    weight: (in_dim, out_dim) with in_dim = T*F; bias: (out_dim,)
    compute_dtype: optional bf16 for v6e/v7x (f32 MXU accumulation); default
    stays f32 to match the PyTorch reference exactly.
    """
    B, T, N, F = X.shape
    in_dim = T * F
    out_dim = weight.shape[1]
    assert weight.shape[0] == in_dim
    assert out_dim % ylength == 0
    out_feat = out_dim // ylength

    # permute(0,2,1,3) + reshape to (B*N, T*F).  Only fuse this transpose into
    # the pallas X operand when the contiguous run after the permute
    # (F * itemsize) is large enough for efficient strided DMA; otherwise
    # materialize it once so the kernel DMA stays dense.
    fuse_x = (F * jnp.dtype(X.dtype).itemsize) >= 256
    H2d = jnp.transpose(X, (0, 2, 1, 3)).reshape(B * N, in_dim)

    w = weight
    if compute_dtype is not None:
        H2d = H2d.astype(compute_dtype)
        w = weight.astype(compute_dtype)

    out2d = pallas_linear(H2d, w, bias, out_dtype=X.dtype, allow_x_fusion=fuse_x)

    # (B*N, out_dim) -> (B, N, ylength, out_feat) -> permute(0,2,1,3)
    out = out2d.reshape(B, N, ylength, out_feat)
    return jnp.transpose(out, (0, 2, 1, 3))


if __name__ == "__main__":
    # Small shapes consistent with the module.
    B, T, N, F = 2, 4, 16, 8            # X: (B, T, N, F)
    in_dim = T * F                       # 32
    ylength = 8
    out_feat = 16
    out_dim = ylength * out_feat         # 128

    key = jax.random.PRNGKey(0)
    kx, kw, kb = jax.random.split(key, 3)

    X = jax.random.normal(kx, (B, T, N, F), dtype=jnp.float32)
    # deterministic nn.Linear-style init: U(-1/sqrt(in_dim), 1/sqrt(in_dim))
    bound = 1.0 / (in_dim ** 0.5)
    weight = jax.random.uniform(kw, (in_dim, out_dim), dtype=jnp.float32,
                                minval=-bound, maxval=bound)
    bias = jax.random.uniform(kb, (out_dim,), dtype=jnp.float32,
                              minval=-bound, maxval=bound)

    fwd = jax.jit(glr_forward, static_argnums=(3,))
    out = jax.block_until_ready(fwd(X, weight, bias, ylength))

    # pure-JAX reference check
    H_ref = jnp.transpose(X, (0, 2, 1, 3)).reshape(B, N, in_dim)
    ref = H_ref @ weight + bias
    ref = jnp.transpose(ref.reshape(B, N, ylength, out_feat), (0, 2, 1, 3))

    assert out.shape == (B, ylength, N, out_feat), out.shape
    assert jnp.allclose(out, ref, atol=1e-5, rtol=1e-5)
    print("KERNEL_OK")
</pallas_src>

<mosaic_0001>
module attributes {stable_mosaic.version = 11 : i64} {
  func.func @_linear_kernel(%arg0: i32, %arg1: i32, %arg2: i32, %arg3: memref<32x32xf32, #tpu.memory_space<vmem>>, %arg4: memref<32x128xf32, #tpu.memory_space<vmem>>, %arg5: memref<1x128xf32, #tpu.memory_space<vmem>>, %arg6: memref<32x128xf32, #tpu.memory_space<vmem>>) attributes {dimension_semantics = [#tpu.dimension_semantics<parallel>, #tpu.dimension_semantics<parallel>, #tpu.dimension_semantics<arbitrary>], iteration_bounds = array<i64: 1, 1, 1>, scalar_prefetch = 0 : i64, scratch_operands = 0 : i64, tpu.core_type = #tpu.core_type<tc>, window_params = [{transform_indices = @transform_0, window_bounds = array<i64: 32, 32>}, {transform_indices = @transform_1, window_bounds = array<i64: 32, 128>}, {transform_indices = @transform_2, window_bounds = array<i64: 1, 128>}, {transform_indices = @transform_3, window_bounds = array<i64: 32, 128>}]} {
    %c0 = arith.constant 0 : index
    %c0_0 = arith.constant 0 : index
    %0 = vector.load %arg3[%c0, %c0_0] : memref<32x32xf32, #tpu.memory_space<vmem>>, vector<32x32xf32>
    %c0_1 = arith.constant 0 : index
    %c0_2 = arith.constant 0 : index
    %1 = vector.load %arg4[%c0_1, %c0_2] : memref<32x128xf32, #tpu.memory_space<vmem>>, vector<32x128xf32>
    %cst = arith.constant dense<0.000000e+00> : vector<32x128xf32>
    %2 = tpu.matmul %0, %1, %cst {dimension_numbers = #tpu.dot_dimension_numbers<[1], [0], [0], [1], [0, 0, 1, 1], [], []>} : vector<32x32xf32>, vector<32x128xf32>, vector<32x128xf32> -> vector<32x128xf32>
    %c0_3 = arith.constant 0 : index
    %c0_4 = arith.constant 0 : index
    %3 = vector.load %arg5[%c0_3, %c0_4] : memref<1x128xf32, #tpu.memory_space<vmem>>, vector<1x128xf32>
    %4 = vector.broadcast %3 : vector<1x128xf32> to vector<32x128xf32>
    %5 = arith.addf %2, %4 : vector<32x128xf32>
    %c0_5 = arith.constant 0 : index
    %c0_6 = arith.constant 0 : index
    %6 = vector.load %arg6[%c0_5, %c0_6] : memref<32x128xf32, #tpu.memory_space<vmem>>, vector<32x128xf32>
    tpu.vector_store %arg6[%c0_5, %c0_6], %5 {strides = array<i32>} : memref<32x128xf32, #tpu.memory_space<vmem>>, vector<32x128xf32>,
    return
  }
  func.func @transform_0(%arg0: i32, %arg1: i32, %arg2: i32) -> (i32, i32) {
    %c0_i32 = arith.constant 0 : i32
    return %arg0, %arg2 : i32, i32
  }
  func.func @transform_1(%arg0: i32, %arg1: i32, %arg2: i32) -> (i32, i32) {
    %c0_i32 = arith.constant 0 : i32
    return %arg2, %arg1 : i32, i32
  }
  func.func @transform_2(%arg0: i32, %arg1: i32, %arg2: i32) -> (i32, i32) {
    %c0_i32 = arith.constant 0 : i32
    %c0_i32_0 = arith.constant 0 : i32
    return %c0_i32, %arg1 : i32, i32
  }
  func.func @transform_3(%arg0: i32, %arg1: i32, %arg2: i32) -> (i32, i32) {
    %c0_i32 = arith.constant 0 : i32
    return %arg0, %arg1 : i32, i32
  }
}

</mosaic_0001>

<llo_original>
// kernel: glr_forward.1
$region0: #{glr_forward.1}
  #allocation0 [shape = 'u32[]', space=smem, size = 0x4, offset = 0x4, fixed_abs, tag = 'smem constant byte address 0x4 - core index']
  #allocation1 [shape = 'u32[144,128]{1,0:T(1,128)}', space=vmem, size = 0x12000, scoped, tag = 'internal scratch']
  %s0 = inlined_call_operand.vmem [shape: f32[32,32], index: 0, kind: input, shape index: {}]
  %s1 = inlined_call_operand.vmem [shape: f32[32,128], index: 1, kind: input, shape index: {}]
  %s2 = inlined_call_operand.vmem [shape: f32[1,128], index: 2, kind: input, shape index: {}]
  %s3 = inlined_call_operand.vmem [shape: f32[32,128], index: 3, kind: output, shape index: {}]
  %s4 = sld [smem:[#allocation0]]
  $region22: #{glr_forward.1} parent=0
    _
  %s6 = ssub.s32 1, %s4
  %s7 = scalar_select 0, %s6, %s4
  // Predicated region
  $region2: #{glr_forward.1} parent=0 // pred_check
    _
  $region3: #{glr_forward.1} parent=0 // pred_check_branch
    %9 = sbr.rel (0) target = $region5
  $region4: #{glr_forward.1} parent=0 // pred_region
    _
  $region5: #{glr_forward.1} parent=0 // pred_fallthru
    _
  // Predicated region
  $region6: #{glr_forward.1} parent=0 // pred_check
    _
  $region7: #{glr_forward.1} parent=0 // pred_check_branch
    %11 = sbr.rel (0) target = $region9
  $region8: #{glr_forward.1} parent=0 // pred_region
    _
  $region9: #{glr_forward.1} parent=0 // pred_fallthru
    _
  // Predicated region
  $region10: #{glr_forward.1} parent=0 // pred_check
    _
  $region11: #{glr_forward.1} parent=0 // pred_check_branch
    %13 = sbr.rel (0) target = $region13
  $region12: #{glr_forward.1} parent=0 // pred_region
    _
  $region13: #{glr_forward.1} parent=0 // pred_fallthru
    _
  %v14 = vld [vmem:[%s0] sm:$0xff]
  %v15 = vld [vmem:[%s0 + $0x8] sm:$0xff]
  %v16 = vld [vmem:[%s0 + $0x10] sm:$0xff]
  %v17 = vld [vmem:[%s0 + $0x18] sm:$0xff]
  %v18 = vld [vmem:[%s1] sm:$0xff]
  %v19 = vld [vmem:[%s1 + $0x8] sm:$0xff]
  %v20 = vld [vmem:[%s1 + $0x10] sm:$0xff]
  %v21 = vld [vmem:[%s1 + $0x18] sm:$0xff]
  %v22 = vld [vmem:[%s2] sm:$0x1]
  %v24 = vlaneseq
  %v25 = vshrl.u32 %v24, 7
  %v26 = vsub.s32 0, %v25
  %v27 = vrot.slane %v22, %v26
  %vm29 = vcmask 261120
  %v31 = vsel %vm29, %v14, 0
  %v34 = vsel %vm29, %v15, 0
  %v37 = vsel %vm29, %v16, 0
  %v40 = vsel %vm29, %v17, 0
  %42 = vmatprep.subr.mxu0 0.0
  %43 = vmatpush1.msra.mxu0 %v18
  %44 = vmatprep.subr.mxu0 0.0
  %45 = vmatpush1.msra.mxu0 %v19
  %46 = vmatprep.subr.mxu0 0.0
  %47 = vmatpush1.msra.mxu0 %v20
  %48 = vmatprep.subr.mxu0 0.0
  %49 = vmatpush1.msra.mxu0 %v21
  %50 = vmatprep.subr.mxu0 0.0
  %51 = vmatpush1.msra.mxu0 0.0
  %52 = vmatprep.subr.mxu0 0.0
  %53 = vmatpush1.msra.mxu0 0.0
  %54 = vmatprep.subr.mxu0 0.0
  %55 = vmatpush1.msra.mxu0 0.0
  %56 = vmatprep.subr.mxu0 0.0
  %57 = vmatpush1.msra.mxu0 0.0
  %58 = vmatprep.subr.mxu0 0.0
  %59 = vmatpush1.msra.mxu0 0.0
  %60 = vmatprep.subr.mxu0 0.0
  %61 = vmatpush1.msra.mxu0 0.0
  %62 = vmatprep.subr.mxu0 0.0
  %63 = vmatpush1.msra.mxu0 0.0
  %64 = vmatprep.subr.mxu0 0.0
  %65 = vmatpush1.msra.mxu0 0.0
  %66 = vmatprep.subr.mxu0 0.0
  %67 = vmatpush1.msra.mxu0 0.0
  %68 = vmatprep.subr.mxu0 0.0
  %69 = vmatpush1.msra.mxu0 0.0
  %70 = vmatprep.subr.mxu0 0.0
  %71 = vmatpush1.msra.mxu0 0.0
  %72 = vmatprep.subr.mxu0 0.0
  %73 = vmatpush1.msra.mxu0 0.0
  %74 = vmatprep.subr.mxu0 0.0
  %75 = vmatpush1.msra.mxu0 0.0
  %76 = vmatprep.subr.mxu0 0.0
  %77 = vmatpush1.msra.mxu0 0.0
  %78 = vmatprep.subr.mxu0 0.0
  %79 = vmatpush1.msra.mxu0 0.0
  %80 = vmatprep.subr.mxu0 0.0
  %81 = vmatpush1.msra.mxu0 0.0
  %82 = vmatprep.subr.mxu0 0.0
  %83 = vmatpush1.msra.mxu0 0.0
  %84 = vmatprep.subr.mxu0 0.0
  %85 = vmatpush1.msra.mxu0 0.0
  %86 = vmatprep.subr.mxu0 0.0
  %87 = vmatpush1.msra.mxu0 0.0
  %88 = vmatprep.subr.mxu0 0.0
  %89 = vmatpush1.msra.mxu0 0.0
  %90 = vmatprep.subr.mxu0 0.0
  %91 = vmatpush1.msra.mxu0 0.0
  %92 = vmatprep.subr.mxu0 0.0
  %93 = vmatpush1.msra.mxu0 0.0
  %94 = vmatprep.subr.mxu0 0.0
  %95 = vmatpush1.msra.mxu0 0.0
  %96 = vmatprep.subr.mxu0 0.0
  %97 = vmatpush1.msra.mxu0 0.0
  %98 = vmatprep.subr.mxu0 0.0
  %99 = vmatpush1.msra.mxu0 0.0
  %100 = vmatprep.subr.mxu0 0.0
  %101 = vmatpush1.msra.mxu0 0.0
  %102 = vmatprep.subr.mxu0 0.0
  %103 = vmatpush1.msra.mxu0 0.0
  %104 = vmatprep.subr.mxu0 0.0
  %105 = vmatpush1.msra.mxu0 0.0
  %106 = vmatprep.mubr.f32.mxu0 0.0
  %107 = vmatmul.mubr.f32.gmra.mrb[0].mxu0 %v31
  %v108 = vpop.f32.mrb[0].mxu0
  %v109 = vadd.f32 %v27, %v108
  %v110 = vpop.f32.mrb[0].mxu0
  %111 = vmatprep.mubr.f32.mxu0 0.0
  %112 = vmatmul.mubr.f32.gmra.mrb[0].mxu0 %v34
  %v113 = vpop.f32.mrb[0].mxu0
  %v114 = vadd.f32 %v27, %v113
  %v115 = vpop.f32.mrb[0].mxu0
  %116 = vmatprep.mubr.f32.mxu0 0.0
  %117 = vmatmul.mubr.f32.gmra.mrb[0].mxu0 %v37
  %v118 = vpop.f32.mrb[0].mxu0
  %v119 = vadd.f32 %v27, %v118
  %v120 = vpop.f32.mrb[0].mxu0
  %121 = vmatprep.mubr.f32.mxu0 0.0
  %122 = vmatmul.mubr.f32.gmra.mrb[0].mxu0 %v40
  %v123 = vpop.f32.mrb[0].mxu0
  %v124 = vadd.f32 %v27, %v123
  %v125 = vpop.f32.mrb[0].mxu0
  %126 = vdwg.mxu0
  %127 = vst [vmem:[%s3] sm:$0xff] %v109
  %128 = vst [vmem:[%s3 + $0x8] sm:$0xff] %v114
  %129 = vst [vmem:[%s3 + $0x10] sm:$0xff] %v119
  %130 = vst [vmem:[%s3 + $0x18] sm:$0xff] %v124
  // Predicated region
  $region14: #{glr_forward.1} parent=0 // pred_check
    _
  $region15: #{glr_forward.1} parent=0 // pred_check_branch
    %132 = sbr.rel (0) target = $region17
  $region16: #{glr_forward.1} parent=0 // pred_region
    _
  $region17: #{glr_forward.1} parent=0 // pred_fallthru
    _
  // Predicated region
  $region18: #{glr_forward.1} parent=0 // pred_check
    _
  $region19: #{glr_forward.1} parent=0 // pred_check_branch
    %134 = sbr.rel (0) target = $region21
  $region20: #{glr_forward.1} parent=0 // pred_region
    _
  $region21: #{glr_forward.1} parent=0 // pred_fallthru
    _

</llo_original>
